<compile_context>
chip_gen: v5e
topology: v5e:2x2
jax: 0.10.0
libtpu: 0.0.40
codegen_flags: <defaults>
</compile_context>

<pallas_src>
import jax
import jax.numpy as jnp
from jax.experimental import pallas as pl
from jax.experimental.pallas import tpu as pltpu


# ------------------------------- kernel --------------------------------------

def gcn_fused_kernel(a_ref, xw1_ref, b1_ref, w2_ref, pa_ref, out_ref, h1_acc):
    """One (i, k) grid step.

    i : row tile of A_hat (node block)        -- megacore "parallel"
    k : contraction tile (neighbor block)     -- innermost, "arbitrary"
    """
    k = pl.program_id(1)
    nk = pl.num_programs(1)

    @pl.when(k == 0)
    def _():
        h1_acc[...] = jnp.zeros_like(h1_acc)

    # This (i, k) tile's contribution to propagate-1: A_hat[i, k] @ XW1[k].
    h1_acc[...] += jnp.dot(a_ref[...], xw1_ref[...],
                           preferred_element_type=jnp.float32)

    # Once this row tile's h1 is complete: bias + ReLU (f32), layer-2 linear,
    # and the folded pooled-propagate PA[:, tile_i] @ (h1 @ W2).  Each i tile
    # writes its own partial (G, O) slab; the sum over i happens in the
    # wrapper, so the i axis carries no accumulator state.
    @pl.when(k == nk - 1)
    def _():
        h1 = jnp.maximum(h1_acc[...] + b1_ref[...], 0.0)               # f32
        h1w2 = jnp.dot(h1.astype(w2_ref.dtype), w2_ref[...],
                       preferred_element_type=jnp.float32)
        out_ref[0] = jnp.dot(pa_ref[...], h1w2.astype(pa_ref.dtype),
                             preferred_element_type=jnp.float32)


# ------------------------------- wrapper --------------------------------------

def _round_up(v, m):
    return ((v + m - 1) // m) * m


def _pad2d(x, rows, cols):
    return jnp.pad(x, ((0, rows - x.shape[0]), (0, cols - x.shape[1])))


def gcn_forward(a_hat, x, w1, b1, w2, b2, pool, *, tile=512):
    """Two-layer GCN + global_mean_pool.

    tile: A_hat row/contraction tile (multiple of 128).  512-1024 reaches the
    HBM roofline on all generations; cap at ~2048 on v7x (64 MiB physical
    VMEM: a 4096 tile alone is 32 MiB x 2 buffers), v5e/v6e (128 MiB) take up
    to 4096.  The clamp below keeps small graphs from over-padding.
    """
    assert tile % 128 == 0, "tile must be a multiple of 128"

    n, f = x.shape
    h = w1.shape[1]
    o = w2.shape[1]
    g = pool.shape[0]

    hp = _round_up(h, 128)          # lane-dense feature dims
    op = _round_up(o, 128)
    gp = _round_up(g, 8)            # sublane-aligned graph dim

    tile = min(tile, _round_up(n, 128))   # don't over-pad tiny graphs
    np_ = _round_up(n, tile)              # node dim (rows + contraction of A_hat)
    ni = np_ // tile                      # number of row tiles

    # Hoisted layer-1 linear (f32 in XLA, then bf16 for the MXU stream) and
    # the pooling fold PA = pool @ A_hat.  Both are O(N*H) / O(G*N) -- tiny
    # next to the O(N^2) propagate that stays in the kernel.
    xw1 = x @ w1                     # (N, H) f32
    pa = pool @ a_hat                # (G, N) f32

    bf = jnp.bfloat16
    # TODO(synk): on v7x, casting a_p / xw1_p / pa_p to fp8 (e4m3) would halve
    # the dominant HBM stream (int8 + scale on v5e/v6e); needs accuracy check.
    a_p = _pad2d(a_hat, np_, np_).astype(bf)
    xw1_p = _pad2d(xw1, np_, hp).astype(bf)
    b1_p = _pad2d(b1, 1, hp).astype(jnp.float32)
    w2_p = _pad2d(w2, hp, op).astype(bf)
    pa_p = _pad2d(pa, gp, np_).astype(bf)

    grid = (ni, ni)

    # VMEM footprint: double-buffered inputs + f32 scratch + output block.
    footprint = (
        2 * tile * tile * 2          # A_hat tile, bf16, 2 buffers
        + 2 * tile * hp * 2          # XW1 tile
        + 2 * gp * tile * 2          # PA column tile
        + 2 * hp * op * 2            # W2 (resident, small)
        + 2 * hp * 4                 # b1
        + 2 * gp * op * 4            # output partial block
        + tile * hp * 4              # h1 accumulator scratch
    )
    vmem_limit = min(64 * 1024 * 1024, int(footprint * 1.5) + 4 * 1024 * 1024)

    partials = pl.pallas_call(
        gcn_fused_kernel,
        out_shape=jax.ShapeDtypeStruct((ni, gp, op), jnp.float32),
        grid_spec=pltpu.PrefetchScalarGridSpec(
            num_scalar_prefetch=0,
            grid=grid,
            in_specs=[
                pl.BlockSpec((tile, tile), lambda i, k: (i, k)),   # A_hat tile
                pl.BlockSpec((tile, hp), lambda i, k: (k, 0)),     # XW1 rows
                pl.BlockSpec((1, hp), lambda i, k: (0, 0)),        # b1
                pl.BlockSpec((hp, op), lambda i, k: (0, 0)),       # W2
                pl.BlockSpec((gp, tile), lambda i, k: (0, i)),     # PA cols for row tile
            ],
            out_specs=pl.BlockSpec((1, gp, op), lambda i, k: (i, 0, 0)),
            scratch_shapes=[
                pltpu.VMEM((tile, hp), jnp.float32),   # h1 row-tile accumulator
            ],
        ),
        compiler_params=pltpu.CompilerParams(
            # i tiles are independent (per-i partial outputs) -> megacore
            # parallel on v7x; k carries the h1 reduction -> arbitrary.
            dimension_semantics=("parallel", "arbitrary"),
            vmem_limit_bytes=vmem_limit,
        ),
    )(a_p, xw1_p, b1_p, w2_p, pa_p)

    # Sum per-row-tile partials (tiny: ni x G x O) and add the bias once.
    # Note: pool rows sum to 1, so pool @ b2 == b2.  (An all-zero pool row --
    # an empty graph -- would get b2 instead of 0; fine for non-empty batches.)
    out = partials.sum(axis=0)[:g, :o] + b2
    return out


# ----------------------------- plain-JAX glue ---------------------------------
# TODO(synk): for realistic sparse graphs, replace the dense A_hat with a
# blocked SpMM (scalar-prefetched per-block neighbor offsets) so work scales
# with |E| instead of N^2.

def build_normalized_adjacency(edge_index, num_nodes):
    """A_hat = D^-1/2 (A + I) D^-1/2  (GCNConv gcn_norm with self loops)."""
    src, dst = edge_index[0], edge_index[1]
    a = jnp.zeros((num_nodes, num_nodes), jnp.float32)
    a = a.at[dst, src].add(1.0)                              # row = target
    a = a + jnp.eye(num_nodes, dtype=jnp.float32)            # self loops
    deg = a.sum(axis=1)
    dinv = jnp.where(deg > 0, 1.0 / jnp.sqrt(deg), 0.0)
    return dinv[:, None] * a * dinv[None, :]


def build_pool_matrix(batch, num_graphs):
    """P[g, n] = 1/count[g] if batch[n] == g else 0  (global_mean_pool)."""
    onehot = (batch[None, :] == jnp.arange(num_graphs)[:, None]).astype(jnp.float32)
    counts = onehot.sum(axis=1, keepdims=True)
    return onehot / jnp.maximum(counts, 1.0)


# --------------------------------- demo ---------------------------------------

if __name__ == "__main__":
    key = jax.random.PRNGKey(0)

    # Small but non-trivial: a batch of QM9-like molecules.
    num_nodes = 200
    num_node_features = 11
    hidden_dim = 32
    output_dim = 4
    num_graphs = 8
    num_edges = 600

    k_x, k_e, k_w1, k_b1, k_w2, k_b2 = jax.random.split(key, 6)

    x = jax.random.normal(k_x, (num_nodes, num_node_features), jnp.float32)
    edge_index = jax.random.randint(k_e, (2, num_edges), 0, num_nodes,
                                    dtype=jnp.int32)
    # Contiguous node -> graph assignment (PyG-style batching), 25 nodes/graph.
    batch = (jnp.arange(num_nodes, dtype=jnp.int32) * num_graphs) // num_nodes

    # GCNConv stores weight as (out, in); keep it pre-transposed as (in, out).
    w1 = jax.random.normal(k_w1, (num_node_features, hidden_dim), jnp.float32) * 0.1
    b1 = jax.random.normal(k_b1, (1, hidden_dim), jnp.float32) * 0.1
    w2 = jax.random.normal(k_w2, (hidden_dim, output_dim), jnp.float32) * 0.1
    b2 = jax.random.normal(k_b2, (1, output_dim), jnp.float32) * 0.1

    a_hat = build_normalized_adjacency(edge_index, num_nodes)
    pool = build_pool_matrix(batch, num_graphs)

    # tile=128 on this tiny demo graph forces a 2x2 grid so the k-reduction,
    # per-i partial outputs and wrapper-side sum are all exercised.  Large
    # graphs should use the default (512) or larger.
    out = gcn_forward(a_hat, x, w1, b1, w2, b2, pool, tile=128)
    out = jax.block_until_ready(out)

    # Pure f32 reference of the original (unfolded) forward pass.
    h_ref = jnp.maximum(a_hat @ (x @ w1) + b1, 0.0)
    h_ref = a_hat @ (h_ref @ w2) + b2
    ref = pool @ h_ref

    assert out.shape == (num_graphs, output_dim)
    # bf16 matmul operands -> loose tolerance vs. full-f32 reference.
    assert jnp.allclose(out, ref, atol=5e-2, rtol=5e-2), (
        float(jnp.max(jnp.abs(out - ref))))

    print("KERNEL_OK")
</pallas_src>

<mosaic_0001>
module attributes {stable_mosaic.version = 11 : i64} {
  func.func @gcn_fused_kernel(%arg0: i32, %arg1: i32, %arg2: memref<128x128xbf16, #tpu.memory_space<vmem>>, %arg3: memref<128x128xbf16, #tpu.memory_space<vmem>>, %arg4: memref<1x128xf32, #tpu.memory_space<vmem>>, %arg5: memref<128x128xbf16, #tpu.memory_space<vmem>>, %arg6: memref<8x128xbf16, #tpu.memory_space<vmem>>, %arg7: memref<1x8x128xf32, #tpu.memory_space<vmem>>, %arg8: memref<128x128xf32, #tpu.memory_space<vmem>>) attributes {dimension_semantics = [#tpu.dimension_semantics<parallel>, #tpu.dimension_semantics<arbitrary>], iteration_bounds = array<i64: 2, 2>, scalar_prefetch = 0 : i64, scratch_operands = 1 : i64, tpu.core_type = #tpu.core_type<tc>, window_params = [{transform_indices = @transform_0, window_bounds = array<i64: 128, 128>}, {transform_indices = @transform_1, window_bounds = array<i64: 128, 128>}, {pipeline_mode = #tpu.pipeline_mode<synchronous>, transform_indices = @transform_2, window_bounds = array<i64: 1, 128>}, {pipeline_mode = #tpu.pipeline_mode<synchronous>, transform_indices = @transform_3, window_bounds = array<i64: 128, 128>}, {transform_indices = @transform_4, window_bounds = array<i64: 8, 128>}, {transform_indices = @transform_5, window_bounds = array<i64: 1, 8, 128>}]} {
    %c0_i32 = arith.constant 0 : i32
    %0 = arith.cmpi eq, %arg1, %c0_i32 : i32
    %1 = arith.extui %0 : i1 to i32
    %c0_i32_0 = arith.constant 0 : i32
    %2 = arith.cmpi ne, %1, %c0_i32_0 : i32
    scf.if %2 {
      %cst_9 = arith.constant 0.000000e+00 : f32
      %12 = vector.broadcast %cst_9 : f32 to vector<128x128xf32>
      %c0_10 = arith.constant 0 : index
      %c0_11 = arith.constant 0 : index
      %13 = vector.load %arg8[%c0_10, %c0_11] : memref<128x128xf32, #tpu.memory_space<vmem>>, vector<128x128xf32>
      tpu.vector_store %arg8[%c0_10, %c0_11], %12 {strides = array<i32>} : memref<128x128xf32, #tpu.memory_space<vmem>>, vector<128x128xf32>,
    } else {
    }
    %c0 = arith.constant 0 : index
    %c0_1 = arith.constant 0 : index
    %3 = vector.load %arg8[%c0, %c0_1] : memref<128x128xf32, #tpu.memory_space<vmem>>, vector<128x128xf32>
    %c0_2 = arith.constant 0 : index
    %c0_3 = arith.constant 0 : index
    %4 = vector.load %arg2[%c0_2, %c0_3] : memref<128x128xbf16, #tpu.memory_space<vmem>>, vector<128x128xbf16>
    %c0_4 = arith.constant 0 : index
    %c0_5 = arith.constant 0 : index
    %5 = vector.load %arg3[%c0_4, %c0_5] : memref<128x128xbf16, #tpu.memory_space<vmem>>, vector<128x128xbf16>
    %cst = arith.constant dense<0.000000e+00> : vector<128x128xf32>
    %6 = tpu.matmul %4, %5, %cst {dimension_numbers = #tpu.dot_dimension_numbers<[1], [0], [0], [1], [0, 0, 1, 1], [], []>} : vector<128x128xbf16>, vector<128x128xbf16>, vector<128x128xf32> -> vector<128x128xf32>
    %7 = arith.addf %3, %6 : vector<128x128xf32>
    %c0_6 = arith.constant 0 : index
    %c0_7 = arith.constant 0 : index
    %8 = vector.load %arg8[%c0_6, %c0_7] : memref<128x128xf32, #tpu.memory_space<vmem>>, vector<128x128xf32>
    tpu.vector_store %arg8[%c0_6, %c0_7], %7 {strides = array<i32>} : memref<128x128xf32, #tpu.memory_space<vmem>>, vector<128x128xf32>,
    %c1_i32 = arith.constant 1 : i32
    %9 = arith.cmpi eq, %arg1, %c1_i32 : i32
    %10 = arith.extui %9 : i1 to i32
    %c0_i32_8 = arith.constant 0 : i32
    %11 = arith.cmpi ne, %10, %c0_i32_8 : i32
    scf.if %11 {
      %c0_9 = arith.constant 0 : index
      %c0_10 = arith.constant 0 : index
      %12 = vector.load %arg8[%c0_9, %c0_10] : memref<128x128xf32, #tpu.memory_space<vmem>>, vector<128x128xf32>
      %c0_11 = arith.constant 0 : index
      %c0_12 = arith.constant 0 : index
      %13 = vector.load %arg4[%c0_11, %c0_12] : memref<1x128xf32, #tpu.memory_space<vmem>>, vector<1x128xf32>
      %14 = vector.broadcast %13 : vector<1x128xf32> to vector<128x128xf32>
      %15 = arith.addf %12, %14 : vector<128x128xf32>
      %cst_13 = arith.constant 0.000000e+00 : f32
      %16 = vector.broadcast %cst_13 : f32 to vector<128x128xf32>
      %17 = arith.maximumf %15, %16 : vector<128x128xf32>
      %18 = arith.truncf %17 : vector<128x128xf32> to vector<128x128xbf16>
      %c0_14 = arith.constant 0 : index
      %c0_15 = arith.constant 0 : index
      %19 = vector.load %arg5[%c0_14, %c0_15] : memref<128x128xbf16, #tpu.memory_space<vmem>>, vector<128x128xbf16>
      %cst_16 = arith.constant dense<0.000000e+00> : vector<128x128xf32>
      %20 = tpu.matmul %18, %19, %cst_16 {dimension_numbers = #tpu.dot_dimension_numbers<[1], [0], [0], [1], [0, 0, 1, 1], [], []>} : vector<128x128xbf16>, vector<128x128xbf16>, vector<128x128xf32> -> vector<128x128xf32>
      %c0_17 = arith.constant 0 : index
      %c0_18 = arith.constant 0 : index
      %21 = vector.load %arg6[%c0_17, %c0_18] : memref<8x128xbf16, #tpu.memory_space<vmem>>, vector<8x128xbf16>
      %22 = arith.truncf %20 : vector<128x128xf32> to vector<128x128xbf16>
      %cst_19 = arith.constant dense<0.000000e+00> : vector<8x128xf32>
      %23 = tpu.matmul %21, %22, %cst_19 {dimension_numbers = #tpu.dot_dimension_numbers<[1], [0], [0], [1], [0, 0, 1, 1], [], []>} : vector<8x128xbf16>, vector<128x128xbf16>, vector<8x128xf32> -> vector<8x128xf32>
      %c0_20 = arith.constant 0 : index
      %c0_21 = arith.constant 0 : index
      %c0_22 = arith.constant 0 : index
      %24 = vector.load %arg7[%c0_20, %c0_21, %c0_22] : memref<1x8x128xf32, #tpu.memory_space<vmem>>, vector<1x8x128xf32>
      %25 = vector.shape_cast %24 : vector<1x8x128xf32> to vector<8x128xf32>
      %26 = vector.shape_cast %23 : vector<8x128xf32> to vector<1x8x128xf32>
      tpu.vector_store %arg7[%c0_20, %c0_21, %c0_22], %26 {strides = array<i32>} : memref<1x8x128xf32, #tpu.memory_space<vmem>>, vector<1x8x128xf32>,
    } else {
    }
    return
  }
  func.func @transform_0(%arg0: i32, %arg1: i32) -> (i32, i32) {
    %c0_i32 = arith.constant 0 : i32
    return %arg0, %arg1 : i32, i32
  }
  func.func @transform_1(%arg0: i32, %arg1: i32) -> (i32, i32) {
    %c0_i32 = arith.constant 0 : i32
    %c0_i32_0 = arith.constant 0 : i32
    return %arg1, %c0_i32 : i32, i32
  }
  func.func @transform_2(%arg0: i32, %arg1: i32) -> (i32, i32) {
    %c0_i32 = arith.constant 0 : i32
    %c0_i32_0 = arith.constant 0 : i32
    %c0_i32_1 = arith.constant 0 : i32
    return %c0_i32, %c0_i32_0 : i32, i32
  }
  func.func @transform_3(%arg0: i32, %arg1: i32) -> (i32, i32) {
    %c0_i32 = arith.constant 0 : i32
    %c0_i32_0 = arith.constant 0 : i32
    %c0_i32_1 = arith.constant 0 : i32
    return %c0_i32, %c0_i32_0 : i32, i32
  }
  func.func @transform_4(%arg0: i32, %arg1: i32) -> (i32, i32) {
    %c0_i32 = arith.constant 0 : i32
    %c0_i32_0 = arith.constant 0 : i32
    return %c0_i32, %arg0 : i32, i32
  }
  func.func @transform_5(%arg0: i32, %arg1: i32) -> (i32, i32, i32) {
    %c0_i32 = arith.constant 0 : i32
    %c0_i32_0 = arith.constant 0 : i32
    %c0_i32_1 = arith.constant 0 : i32
    return %arg0, %c0_i32, %c0_i32_0 : i32, i32, i32
  }
}

</mosaic_0001>

<llo_original>
// kernel: tpu_custom_call.1
$region0: #{tpu_custom_call.1}
  #allocation0 [shape = 'u32[]', space=smem, size = 0x4, offset = 0x4, fixed_abs, tag = 'smem constant byte address 0x4 - core index']
  #allocation1 [shape = 'u32[72,128]{1,0:T(1,128)}', space=vmem, size = 0x9000, scoped, tag = 'internal scratch']
  #allocation2 [shape = 'f32[128,128]{1,0:T(8,128)}', space=vmem, size = 0x10000, scoped, tag = 'scratch operand']
  %s0 = inlined_call_operand.hbm [shape: bf16[256,256], index: 0, kind: input, shape index: {}]
  %s1 = inlined_call_operand.hbm [shape: bf16[256,128], index: 1, kind: input, shape index: {}]
  %s2 = inlined_call_operand.vmem [shape: f32[1,128], index: 2, kind: input, shape index: {}]
  %s3 = inlined_call_operand.hbm [shape: bf16[128,128], index: 3, kind: input, shape index: {}]
  %s4 = inlined_call_operand.hbm [shape: bf16[8,256], index: 4, kind: input, shape index: {}]
  %s5 = inlined_call_operand.hbm [shape: f32[2,8,128], index: 5, kind: output, shape index: {}]
  %s6 = sld [smem:[#allocation0]]
  $region77: #{tpu_custom_call.1} parent=0
    _
  %s8 = ssub.s32 1, %s6
  %s9 = scalar_select 0, %s8, %s6
  $region1: #{tpu_custom_call.1} parent=0
    #allocation3 [shape = 'u8[65536]{0}', space=vmem, size = 0x10000, scoped, tag = 'input window, operand 0']
    #allocation4 [shape = 's32[2]{0}', space=sflag, size = 0x8, scoped, tag = 'scoped memory for tpu_custom_call.1']
    #allocation5 [shape = 's32[2]{0}', space=sflag, size = 0x8, scoped, tag = 'scoped memory for tpu_custom_call.1']
    #allocation6 [shape = 'u8[65536]{0}', space=vmem, size = 0x10000, scoped, tag = 'input window, operand 1']
    #allocation7 [shape = 's32[2]{0}', space=sflag, size = 0x8, scoped, tag = 'scoped memory for tpu_custom_call.1']
    #allocation8 [shape = 'u8[32768]{0}', space=vmem, size = 0x8000, scoped, tag = 'input window, operand 3, single buffered']
    #allocation9 [shape = 'u8[4096]{0}', space=vmem, size = 0x1000, scoped, tag = 'input window, operand 4']
    #allocation10 [shape = 's32[2]{0}', space=sflag, size = 0x8, scoped, tag = 'scoped memory for tpu_custom_call.1']
    #allocation11 [shape = 'u8[8192]{0}', space=vmem, size = 0x2000, scoped, tag = 'output window, operand 0']
    %10 = vsyncpa [#allocation4], 0
    %s11 = scalar_lea.sflag [#allocation4], 1
    %12 = vsyncpa %s11, 0
    %13 = vsyncpa [#allocation7], 0
    %s14 = scalar_lea.sflag [#allocation7], 1
    %15 = vsyncpa %s14, 0
    %16 = vsyncpa [#allocation10], 0
    %s17 = scalar_lea.sflag [#allocation10], 1
    %18 = vsyncpa %s17, 0
    %19 = vsyncpa [#allocation5], 0
    %s20 = scalar_lea.sflag [#allocation5], 1
    %21 = vsyncpa %s20, 0
    loop: start=0, step=1, limit=6
    $region2: #{tpu_custom_call.1} parent=1 // loop_pre_header
      _
    $region3: #{tpu_custom_call.1} parent=1 // loop_header
      %s23 = sphi 0, %s27
      %p24 = scmp.ge.s32.totalorder %s23, 6
      %s30 = sphi 0, %s42
      %s31 = sphi 0, %s38
      %s32 = sphi 0, %s30
      %s33 = sphi 0, %s31
      %s34 = sphi 0, %s32
      %s35 = sphi 0, %s33
      %s47 = sphi 0, %s49
      %s50 = sphi 0, %s47
      %s51 = sphi 0, %s50
      %s67 = sphi 0, %s51
      %s73 = sphi 0, %s75
      %s76 = sphi 0, %s73
      %s77 = sphi 0, %s76
      %s93 = sphi 0, %s77
      %s97 = sphi 0, %s97
      %s99 = sphi 0, %s97
      %s100 = sphi 0, %s99
      %s114 = sphi 0, %s100
      %s118 = sphi 0, %s118
      %s120 = sphi 0, %s118
      %s121 = sphi 0, %s120
      %s135 = sphi 0, %s121
      %s141 = sphi 0, %s143
      %s144 = sphi 0, %s141
      %s145 = sphi 0, %s144
      %s161 = sphi 0, %s145
      %s167 = sphi 0, %s169
      %s170 = sphi 0, %s167
      %s171 = sphi 0, %s170
      %s187 = sphi 0, %s171
    $region4: #{tpu_custom_call.1} parent=1 // loop_header_branch
      %26 = sbr.rel (%p24) target = $region8
    $region5: #{tpu_custom_call.1} parent=1 // loop_body
      %s28 = ssub.s32 %s23, 1
      %s29 = ssub.s32 %s23, 2
      %s36 = sadd.s32 1, %s31
      %p37 = scmp.ge.s32.totalorder %s36, 2
      %s38 = scalar_select %p37, 0, %s36
      %s39 = sadd.s32 1, %s30
      %s40 = scalar_select %p37, %s39, %s30
      %p41 = scmp.ge.s32.totalorder %s40, 2
      %s42 = scalar_select %p41, 0, %s40
      %s43 = ssub.s32 %s30, %s42
      %s44 = ssub.s32 %s31, %s38
      %s45 = sor.u32 %s43, %s44
      %p46 = scmp.eq.s32.totalorder %s45, 0
      %s48 = sadd.s32 %s47, 1
      %s49 = scalar_select %p46, %s47, %s48
      %p52 = pneg %p46
      %p53 = scmp.eq.s32.totalorder %s23, 3
      %p54 = por %p52, %p53
      %p55 = scmp.ne.s32.totalorder %s47, %s50
      %p56 = scmp.eq.s32.totalorder %s23, 0
      %p57 = por %p55, %p56
      %p58 = scmp.ne.s32.totalorder %s47, %s50
      %p59 = scmp.eq.s32.totalorder %s28, 3
      %p60 = por %p58, %p59
      %p61 = scmp.ne.s32.totalorder %s50, %s51
      %p62 = scmp.eq.s32.totalorder %s28, 0
      %p63 = por %p61, %p62
      %p64 = scmp.ne.s32.totalorder %s50, %s51
      %p65 = scmp.eq.s32.totalorder %s29, 3
      %p66 = por %p64, %p65
      %p68 = scmp.ne.s32.totalorder %s51, %s67
      %p69 = scmp.eq.s32.totalorder %s29, 0
      %p70 = por %p68, %p69
      %s71 = ssub.s32 %s31, %s38
      %p72 = scmp.eq.s32.totalorder %s71, 0
      %s74 = sadd.s32 %s73, 1
      %s75 = scalar_select %p72, %s73, %s74
      %p78 = pneg %p72
      %p79 = scmp.eq.s32.totalorder %s23, 3
      %p80 = por %p78, %p79
      %p81 = scmp.ne.s32.totalorder %s73, %s76
      %p82 = scmp.eq.s32.totalorder %s23, 0
      %p83 = por %p81, %p82
      %p84 = scmp.ne.s32.totalorder %s73, %s76
      %p85 = scmp.eq.s32.totalorder %s28, 3
      %p86 = por %p84, %p85
      %p87 = scmp.ne.s32.totalorder %s76, %s77
      %p88 = scmp.eq.s32.totalorder %s28, 0
      %p89 = por %p87, %p88
      %p90 = scmp.ne.s32.totalorder %s76, %s77
      %p91 = scmp.eq.s32.totalorder %s29, 3
      %p92 = por %p90, %p91
      %p94 = scmp.ne.s32.totalorder %s77, %s93
      %p95 = scmp.eq.s32.totalorder %s29, 0
      %p96 = por %p94, %p95
      %s98 = sadd.s32 %s97, 1
      %p101 = scmp.eq.s32.totalorder %s23, 3
      %p102 = scmp.ne.s32.totalorder %s97, %s99
      %p103 = scmp.eq.s32.totalorder %s23, 0
      %p104 = por %p102, %p103
      %p105 = scmp.ne.s32.totalorder %s97, %s99
      %p106 = scmp.eq.s32.totalorder %s28, 3
      %p107 = por %p105, %p106
      %p108 = scmp.ne.s32.totalorder %s99, %s100
      %p109 = scmp.eq.s32.totalorder %s28, 0
      %p110 = por %p108, %p109
      %p111 = scmp.ne.s32.totalorder %s99, %s100
      %p112 = scmp.eq.s32.totalorder %s29, 3
      %p113 = por %p111, %p112
      %p115 = scmp.ne.s32.totalorder %s100, %s114
      %p116 = scmp.eq.s32.totalorder %s29, 0
      %p117 = por %p115, %p116
      %s119 = sadd.s32 %s118, 1
      %p122 = scmp.eq.s32.totalorder %s23, 3
      %p123 = scmp.ne.s32.totalorder %s118, %s120
      %p124 = scmp.eq.s32.totalorder %s23, 0
      %p125 = por %p123, %p124
      %p126 = scmp.ne.s32.totalorder %s118, %s120
      %p127 = scmp.eq.s32.totalorder %s28, 3
      %p128 = por %p126, %p127
      %p129 = scmp.ne.s32.totalorder %s120, %s121
      %p130 = scmp.eq.s32.totalorder %s28, 0
      %p131 = por %p129, %p130
      %p132 = scmp.ne.s32.totalorder %s120, %s121
      %p133 = scmp.eq.s32.totalorder %s29, 3
      %p134 = por %p132, %p133
      %p136 = scmp.ne.s32.totalorder %s121, %s135
      %p137 = scmp.eq.s32.totalorder %s29, 0
      %p138 = por %p136, %p137
      %s139 = ssub.s32 %s30, %s42
      %p140 = scmp.eq.s32.totalorder %s139, 0
      %s142 = sadd.s32 %s141, 1
      %s143 = scalar_select %p140, %s141, %s142
      %p146 = pneg %p140
      %p147 = scmp.eq.s32.totalorder %s23, 3
      %p148 = por %p146, %p147
      %p149 = scmp.ne.s32.totalorder %s141, %s144
      %p150 = scmp.eq.s32.totalorder %s23, 0
      %p151 = por %p149, %p150
      %p152 = scmp.ne.s32.totalorder %s141, %s144
      %p153 = scmp.eq.s32.totalorder %s28, 3
      %p154 = por %p152, %p153
      %p155 = scmp.ne.s32.totalorder %s144, %s145
      %p156 = scmp.eq.s32.totalorder %s28, 0
      %p157 = por %p155, %p156
      %p158 = scmp.ne.s32.totalorder %s144, %s145
      %p159 = scmp.eq.s32.totalorder %s29, 3
      %p160 = por %p158, %p159
      %p162 = scmp.ne.s32.totalorder %s145, %s161
      %p163 = scmp.eq.s32.totalorder %s29, 0
      %p164 = por %p162, %p163
      %s165 = ssub.s32 %s30, %s42
      %p166 = scmp.eq.s32.totalorder %s165, 0
      %s168 = sadd.s32 %s167, 1
      %s169 = scalar_select %p166, %s167, %s168
      %p172 = pneg %p166
      %p173 = scmp.eq.s32.totalorder %s23, 3
      %p174 = por %p172, %p173
      %p175 = scmp.ne.s32.totalorder %s167, %s170
      %p176 = scmp.eq.s32.totalorder %s23, 0
      %p177 = por %p175, %p176
      %p178 = scmp.ne.s32.totalorder %s167, %s170
      %p179 = scmp.eq.s32.totalorder %s28, 3
      %p180 = por %p178, %p179
      %p181 = scmp.ne.s32.totalorder %s170, %s171
      %p182 = scmp.eq.s32.totalorder %s28, 0
      %p183 = por %p181, %p182
      %p184 = scmp.ne.s32.totalorder %s170, %s171
      %p185 = scmp.eq.s32.totalorder %s29, 3
      %p186 = por %p184, %p185
      %p188 = scmp.ne.s32.totalorder %s171, %s187
      %p189 = scmp.eq.s32.totalorder %s29, 0
      %p190 = por %p188, %p189
      %p191 = scmp.le.s32.totalorder 1, %s23
      %p192 = scmp.lt.s32.totalorder %s23, 5
      %p193 = pnand %p191, %p192
      %p194 = pneg %p193
      // Predicated region
      $region9: #{tpu_custom_call.1} parent=5 // pred_check
        _
      $region10: #{tpu_custom_call.1} parent=5 // pred_check_branch
        %196 = sbr.rel (%p193) target = $region12
      $region11: #{tpu_custom_call.1} parent=5 // pred_region
        %s197 = ssub.s32 %s23, 1
        // Predicated region
        $region13: #{tpu_custom_call.1} parent=11 // pred_check
          %p198 = pneg %p110
        $region14: #{tpu_custom_call.1} parent=11 // pred_check_branch
          %200 = sbr.rel (%p198) target = $region16
        $region15: #{tpu_custom_call.1} parent=11 // pred_region
          _
        $region16: #{tpu_custom_call.1} parent=11 // pred_fallthru
          _
        // Predicated region
        $region17: #{tpu_custom_call.1} parent=11 // pred_check
          %p201 = pneg %p131
        $region18: #{tpu_custom_call.1} parent=11 // pred_check_branch
          %203 = sbr.rel (%p201) target = $region20
        $region19: #{tpu_custom_call.1} parent=11 // pred_region
          %205 = vsyncadd [#allocation7], 0
          %s206 = sshll.u32 %s3, 4
          %s207 = int_to_ptr.hbm [resolvable:$true] %s206
          %s208 = sshll.u32 [#allocation8], 4
          %s209 = int_to_ptr.vmem [resolvable:$true] %s208
          %214 = dma.hbm_to_vmem [thread:$0]  %s207, 1024, %s209, [#allocation7], 64, 64, 4
        $region20: #{tpu_custom_call.1} parent=11 // pred_fallthru
          _
      $region12: #{tpu_custom_call.1} parent=5 // pred_fallthru
        _
      %p215 = scmp.lt.s32.totalorder %s23, 4
      // Predicated region
      $region21: #{tpu_custom_call.1} parent=5 // pred_check
        %p216 = pneg %p215
      $region22: #{tpu_custom_call.1} parent=5 // pred_check_branch
        %218 = sbr.rel (%p216) target = $region24
      $region23: #{tpu_custom_call.1} parent=5 // pred_region
        // Predicated region
        $region25: #{tpu_custom_call.1} parent=23 // pred_check
          %p219 = pneg %p57
        $region26: #{tpu_custom_call.1} parent=23 // pred_check_branch
          %221 = sbr.rel (%p219) target = $region28
        $region27: #{tpu_custom_call.1} parent=23 // pred_region
          %s222 = sand.u32 %s47, 1
          %s223 = scalar_lea.sflag [#allocation4], %s222
          %s224 = sand.u32 %s47, 1
          %s225 = smul.addr %s224, 64
          %s226 = scalar_lea.vmem [#allocation3], %s225
          %s227 = smul.u32 16, %s30
          %229 = vsyncadd %s223, 0
          %s230 = smul.addr %s227, 2
          %s231 = sadd.s32 %s31, %s230
          %s232 = smul.addr %s231, 4
          %s233 = scalar_lea.hbm %s0, %s232
          %s234 = sshll.u32 %s233, 4
          %s235 = int_to_ptr.hbm [resolvable:$true] %s234
          %s236 = sshll.u32 %s226, 4
          %s237 = int_to_ptr.vmem [resolvable:$true] %s236
          %242 = dma.hbm_to_vmem [thread:$0]  %s235, 1024, %s237, %s223, 128, 64, 4
        $region28: #{tpu_custom_call.1} parent=23 // pred_fallthru
          _
        // Predicated region
        $region29: #{tpu_custom_call.1} parent=23 // pred_check
          %p243 = pneg %p83
        $region30: #{tpu_custom_call.1} parent=23 // pred_check_branch
          %245 = sbr.rel (%p243) target = $region32
        $region31: #{tpu_custom_call.1} parent=23 // pred_region
          %s246 = sand.u32 %s23, 1
          %s247 = scalar_lea.sflag [#allocation7], %s246
          %s248 = sand.u32 %s73, 1
          %s249 = smul.addr %s248, 64
          %s250 = scalar_lea.vmem [#allocation6], %s249
          %s251 = smul.u32 16, %s31
          %253 = vsyncadd %s247, 0
          %s254 = smul.addr %s251, 4
          %s255 = scalar_lea.hbm %s1, %s254
          %s256 = sshll.u32 %s255, 4
          %s257 = int_to_ptr.hbm [resolvable:$true] %s256
          %s258 = sshll.u32 %s250, 4
          %s259 = int_to_ptr.vmem [resolvable:$true] %s258
          %264 = dma.hbm_to_vmem [thread:$0]  %s257, 1024, %s259, %s247, 64, 64, 4
        $region32: #{tpu_custom_call.1} parent=23 // pred_fallthru
          _
        // Predicated region
        $region33: #{tpu_custom_call.1} parent=23 // pred_check
          %p265 = pneg %p151
        $region34: #{tpu_custom_call.1} parent=23 // pred_check_branch
          %267 = sbr.rel (%p265) target = $region36
        $region35: #{tpu_custom_call.1} parent=23 // pred_region
          %s268 = sand.u32 %s141, 1
          %s269 = scalar_lea.sflag [#allocation10], %s268
          %s270 = sand.u32 %s141, 1
          %s271 = smul.addr %s270, 4
          %s272 = scalar_lea.vmem [#allocation9], %s271
          %274 = vsyncadd %s269, 0
          %s275 = smul.addr %s30, 4
          %s276 = scalar_lea.hbm %s4, %s275
          %s278 = sshll.u32 %s276, 4
          %s279 = int_to_ptr.hbm [resolvable:$true] %s278
          %s280 = sshll.u32 %s272, 4
          %s281 = int_to_ptr.vmem [resolvable:$true] %s280
          %283 = dma.hbm_to_vmem [thread:$0]  %s279, 64, %s281, %s269
        $region36: #{tpu_custom_call.1} parent=23 // pred_fallthru
          _
      $region24: #{tpu_custom_call.1} parent=5 // pred_fallthru
        _
      %p284 = scmp.le.s32.totalorder 1, %s23
      %p285 = scmp.lt.s32.totalorder %s23, 5
      %p286 = pnand %p284, %p285
      %p287 = pneg %p286
      // Predicated region
      $region37: #{tpu_custom_call.1} parent=5 // pred_check
        _
      $region38: #{tpu_custom_call.1} parent=5 // pred_check_branch
        %289 = sbr.rel (%p286) target = $region40
      $region39: #{tpu_custom_call.1} parent=5 // pred_region
        %s290 = ssub.s32 %s23, 1
        %s291 = sand.u32 %s50, 1
        %s292 = scalar_lea.sflag [#allocation4], %s291
        %s293 = sand.u32 %s50, 1
        %s294 = smul.addr %s293, 64
        %s295 = scalar_lea.vmem [#allocation3], %s294
        // Predicated region
        $region41: #{tpu_custom_call.1} parent=39 // pred_check
          %p296 = pneg %p63
        $region42: #{tpu_custom_call.1} parent=39 // pred_check_branch
          %298 = sbr.rel (%p296) target = $region44
        $region43: #{tpu_custom_call.1} parent=39 // pred_region
          %300 = dma.done %s292, 1024
        $region44: #{tpu_custom_call.1} parent=39 // pred_fallthru
          _
        %s301 = sand.u32 %s28, 1
        %s302 = scalar_lea.sflag [#allocation7], %s301
        %s303 = sand.u32 %s76, 1
        %s304 = smul.addr %s303, 64
        %s305 = scalar_lea.vmem [#allocation6], %s304
        // Predicated region
        $region45: #{tpu_custom_call.1} parent=39 // pred_check
          %p306 = pneg %p89
        $region46: #{tpu_custom_call.1} parent=39 // pred_check_branch
          %308 = sbr.rel (%p306) target = $region48
        $region47: #{tpu_custom_call.1} parent=39 // pred_region
          %310 = dma.done %s302, 1024
        $region48: #{tpu_custom_call.1} parent=39 // pred_fallthru
          _
        // Predicated region
        $region49: #{tpu_custom_call.1} parent=39 // pred_check
          %p311 = pneg %p131
        $region50: #{tpu_custom_call.1} parent=39 // pred_check_branch
          %313 = sbr.rel (%p311) target = $region52
        $region51: #{tpu_custom_call.1} parent=39 // pred_region
          %315 = dma.done [#allocation7], 1024
        $region52: #{tpu_custom_call.1} parent=39 // pred_fallthru
          _
        %s316 = sand.u32 %s144, 1
        %s317 = scalar_lea.sflag [#allocation10], %s316
        %s318 = sand.u32 %s144, 1
        %s319 = smul.addr %s318, 4
        %s320 = scalar_lea.vmem [#allocation9], %s319
        // Predicated region
        $region53: #{tpu_custom_call.1} parent=39 // pred_check
          %p321 = pneg %p157
        $region54: #{tpu_custom_call.1} parent=39 // pred_check_branch
          %323 = sbr.rel (%p321) target = $region56
        $region55: #{tpu_custom_call.1} parent=39 // pred_region
          %325 = dma.done %s317, 64
        $region56: #{tpu_custom_call.1} parent=39 // pred_fallthru
          _
        %s326 = sand.u32 %s50, 1
        %s327 = scalar_lea.sflag [#allocation4], %s326
        %s328 = sand.u32 %s50, 1
        %s329 = smul.addr %s328, 64
        %s330 = scalar_lea.vmem [#allocation3], %s329
        %p331 = pneg %p63
        %p332 = pneg %p60
        %s333 = sand.u32 %s28, 1
        %s334 = scalar_lea.sflag [#allocation7], %s333
        %s335 = sand.u32 %s76, 1
        %s336 = smul.addr %s335, 64
        %s337 = scalar_lea.vmem [#allocation6], %s336
        %p338 = pneg %p89
        %p339 = pneg %p86
        %p340 = pneg %p110
        %p341 = pneg %p107
        %p342 = pneg %p131
        %p343 = pneg %p128
        %s344 = sand.u32 %s144, 1
        %s345 = scalar_lea.sflag [#allocation10], %s344
        %s346 = sand.u32 %s144, 1
        %s347 = smul.addr %s346, 4
        %s348 = scalar_lea.vmem [#allocation9], %s347
        %p349 = pneg %p157
        %p350 = pneg %p154
        %p351 = pneg %p183
        %p352 = pneg %p180
        %s353 = sand.u32 %s170, 1
        %s354 = scalar_lea.sflag [#allocation5], %s353
        %s355 = sand.u32 %s170, 1
        %s356 = smul.addr %s355, 8
        %s357 = scalar_lea.vmem [#allocation11], %s356
        %s358 = smul.u32 16, %s32
        %s359 = smul.u32 16, %s33
        %p360 = scmp.eq.s32.totalorder %s33, 0
        // Predicated region
        $region57: #{tpu_custom_call.1} parent=39 // pred_check
          %p361 = pneg %p360
        $region58: #{tpu_custom_call.1} parent=39 // pred_check_branch
          %363 = sbr.rel (%p361) target = $region60
        $region59: #{tpu_custom_call.1} parent=39 // pred_region
          %364 = vst [vmem:[#allocation2] sm:$0xff] 0.0
          %365 = vst [vmem:[#allocation2 + $0x8] sm:$0xff] 0.0
          %366 = vst [vmem:[#allocation2 + $0x10] sm:$0xff] 0.0
          %367 = vst [vmem:[#allocation2 + $0x18] sm:$0xff] 0.0
          %368 = vst [vmem:[#allocation2 + $0x20] sm:$0xff] 0.0
          %369 = vst [vmem:[#allocation2 + $0x28] sm:$0xff] 0.0
          %370 = vst [vmem:[#allocation2 + $0x30] sm:$0xff] 0.0
          %371 = vst [vmem:[#allocation2 + $0x38] sm:$0xff] 0.0
          %372 = vst [vmem:[#allocation2 + $0x40] sm:$0xff] 0.0
          %373 = vst [vmem:[#allocation2 + $0x48] sm:$0xff] 0.0
          %374 = vst [vmem:[#allocation2 + $0x50] sm:$0xff] 0.0
          %375 = vst [vmem:[#allocation2 + $0x58] sm:$0xff] 0.0
          %376 = vst [vmem:[#allocation2 + $0x60] sm:$0xff] 0.0
          %377 = vst [vmem:[#allocation2 + $0x68] sm:$0xff] 0.0
          %378 = vst [vmem:[#allocation2 + $0x70] sm:$0xff] 0.0
          %379 = vst [vmem:[#allocation2 + $0x78] sm:$0xff] 0.0
        $region60: #{tpu_custom_call.1} parent=39 // pred_fallthru
          _
        %v380 = vld [vmem:[#allocation2] sm:$0xff]
        %v381 = vld [vmem:[#allocation2 + $0x8] sm:$0xff]
        %v382 = vld [vmem:[#allocation2 + $0x10] sm:$0xff]
        %v383 = vld [vmem:[#allocation2 + $0x18] sm:$0xff]
        %v384 = vld [vmem:[#allocation2 + $0x20] sm:$0xff]
        %v385 = vld [vmem:[#allocation2 + $0x28] sm:$0xff]
        %v386 = vld [vmem:[#allocation2 + $0x30] sm:$0xff]
        %v387 = vld [vmem:[#allocation2 + $0x38] sm:$0xff]
        %v388 = vld [vmem:[#allocation2 + $0x40] sm:$0xff]
        %v389 = vld [vmem:[#allocation2 + $0x48] sm:$0xff]
        %v390 = vld [vmem:[#allocation2 + $0x50] sm:$0xff]
        %v391 = vld [vmem:[#allocation2 + $0x58] sm:$0xff]
        %v392 = vld [vmem:[#allocation2 + $0x60] sm:$0xff]
        %v393 = vld [vmem:[#allocation2 + $0x68] sm:$0xff]
        %v394 = vld [vmem:[#allocation2 + $0x70] sm:$0xff]
        %v395 = vld [vmem:[#allocation2 + $0x78] sm:$0xff]
        %v396 = vld [vmem:[%s295] sm:$0xf]
        %v397 = vld [vmem:[%s295 + $0x4] sm:$0xf]
        %v398 = vld [vmem:[%s295 + $0x8] sm:$0xf]
        %v399 = vld [vmem:[%s295 + $0xc] sm:$0xf]
        %v400 = vld [vmem:[%s295 + $0x10] sm:$0xf]
        %v401 = vld [vmem:[%s295 + $0x14] sm:$0xf]
        %v402 = vld [vmem:[%s295 + $0x18] sm:$0xf]
        %v403 = vld [vmem:[%s295 + $0x1c] sm:$0xf]
        %v404 = vld [vmem:[%s295 + $0x20] sm:$0xf]
        %v405 = vld [vmem:[%s295 + $0x24] sm:$0xf]
        %v406 = vld [vmem:[%s295 + $0x28] sm:$0xf]
        %v407 = vld [vmem:[%s295 + $0x2c] sm:$0xf]
        %v408 = vld [vmem:[%s295 + $0x30] sm:$0xf]
        %v409 = vld [vmem:[%s295 + $0x34] sm:$0xf]
        %v410 = vld [vmem:[%s295 + $0x38] sm:$0xf]
        %v411 = vld [vmem:[%s295 + $0x3c] sm:$0xf]
        %v412 = vld [vmem:[%s305] sm:$0xf]
        %v413 = vld [vmem:[%s305 + $0x4] sm:$0xf]
        %v414 = vld [vmem:[%s305 + $0x8] sm:$0xf]
        %v415 = vld [vmem:[%s305 + $0xc] sm:$0xf]
        %v416 = vld [vmem:[%s305 + $0x10] sm:$0xf]
        %v417 = vld [vmem:[%s305 + $0x14] sm:$0xf]
        %v418 = vld [vmem:[%s305 + $0x18] sm:$0xf]
        %v419 = vld [vmem:[%s305 + $0x1c] sm:$0xf]
        %v420 = vld [vmem:[%s305 + $0x20] sm:$0xf]
        %v421 = vld [vmem:[%s305 + $0x24] sm:$0xf]
        %v422 = vld [vmem:[%s305 + $0x28] sm:$0xf]
        %v423 = vld [vmem:[%s305 + $0x2c] sm:$0xf]
        %v424 = vld [vmem:[%s305 + $0x30] sm:$0xf]
        %v425 = vld [vmem:[%s305 + $0x34] sm:$0xf]
        %v426 = vld [vmem:[%s305 + $0x38] sm:$0xf]
        %v427 = vld [vmem:[%s305 + $0x3c] sm:$0xf]
        %v444 = vunpack.c.l.b16 %v396
        %v445 = vunpack.c.l.b16 %v397
        %v446 = vunpack.c.l.b16 %v398
        %v447 = vunpack.c.l.b16 %v399
        %v448 = vunpack.c.l.b16 %v400
        %v449 = vunpack.c.l.b16 %v401
        %v450 = vunpack.c.l.b16 %v402
        %v451 = vunpack.c.l.b16 %v403
        %v452 = vunpack.c.l.b16 %v404
        %v453 = vunpack.c.l.b16 %v405
        %v454 = vunpack.c.l.b16 %v406
        %v455 = vunpack.c.l.b16 %v407
        %v456 = vunpack.c.l.b16 %v408
        %v457 = vunpack.c.l.b16 %v409
        %v458 = vunpack.c.l.b16 %v410
        %v459 = vunpack.c.l.b16 %v411
        %v460 = vpack.c.b16 %v445, %v444
        %v461 = vpack.c.b16 %v447, %v446
        %v462 = vpack.c.b16 %v449, %v448
        %v463 = vpack.c.b16 %v451, %v450
        %v464 = vpack.c.b16 %v453, %v452
        %v465 = vpack.c.b16 %v455, %v454
        %v466 = vpack.c.b16 %v457, %v456
        %v467 = vpack.c.b16 %v459, %v458
        %v492 = vunpack.c.l.b16 %v412
        %v493 = vunpack.c.l.b16 %v413
        %v494 = vunpack.c.l.b16 %v414
        %v495 = vunpack.c.l.b16 %v415
        %v496 = vunpack.c.l.b16 %v416
        %v497 = vunpack.c.l.b16 %v417
        %v498 = vunpack.c.l.b16 %v418
        %v499 = vunpack.c.l.b16 %v419
        %v500 = vunpack.c.l.b16 %v420
        %v501 = vunpack.c.l.b16 %v421
        %v502 = vunpack.c.l.b16 %v422
        %v503 = vunpack.c.l.b16 %v423
        %v504 = vunpack.c.l.b16 %v424
        %v505 = vunpack.c.l.b16 %v425
        %v506 = vunpack.c.l.b16 %v426
        %v507 = vunpack.c.l.b16 %v427
        %v508 = vpack.c.b16 %v493, %v492
        %v509 = vpack.c.b16 %v495, %v494
        %v510 = vpack.c.b16 %v497, %v496
        %v511 = vpack.c.b16 %v499, %v498
        %v512 = vpack.c.b16 %v501, %v500
        %v513 = vpack.c.b16 %v503, %v502
        %v514 = vpack.c.b16 %v505, %v504
        %v515 = vpack.c.b16 %v507, %v506
        %524 = vmatpush.bf16.msra.mxu0 %v515
        %525 = vmatpush.bf16.msra.mxu0 %v514
        %526 = vmatpush.bf16.msra.mxu0 %v513
        %527 = vmatpush.bf16.msra.mxu0 %v512
        %528 = vmatpush.bf16.msra.mxu0 %v511
        %529 = vmatpush.bf16.msra.mxu0 %v510
        %530 = vmatpush.bf16.msra.mxu0 %v509
        %531 = vmatpush.bf16.msra.mxu0 %v508
        %532 = vmatmul.bf16.gmra.mxu0 %v460
        %v533 = vpop.f32.mrf.mxu0
        %v534 = vadd.f32 0.0, %v533
        %v535 = vpop.f32.mrf.mxu0
        %v536 = vadd.f32 0.0, %v535
        %537 = vmatmul.bf16.gmra.mxu0 %v461
        %v538 = vpop.f32.mrf.mxu0
        %v539 = vadd.f32 0.0, %v538
        %v540 = vpop.f32.mrf.mxu0
        %v541 = vadd.f32 0.0, %v540
        %542 = vmatmul.bf16.gmra.mxu0 %v462
        %v543 = vpop.f32.mrf.mxu0
        %v544 = vadd.f32 0.0, %v543
        %v545 = vpop.f32.mrf.mxu0
        %v546 = vadd.f32 0.0, %v545
        %547 = vmatmul.bf16.gmra.mxu0 %v463
        %v548 = vpop.f32.mrf.mxu0
        %v549 = vadd.f32 0.0, %v548
        %v550 = vpop.f32.mrf.mxu0
        %v551 = vadd.f32 0.0, %v550
        %552 = vmatmul.bf16.gmra.mxu0 %v464
        %v553 = vpop.f32.mrf.mxu0
        %v554 = vadd.f32 0.0, %v553
        %v555 = vpop.f32.mrf.mxu0
        %v556 = vadd.f32 0.0, %v555
        %557 = vmatmul.bf16.gmra.mxu0 %v465
        %v558 = vpop.f32.mrf.mxu0
        %v559 = vadd.f32 0.0, %v558
        %v560 = vpop.f32.mrf.mxu0
        %v561 = vadd.f32 0.0, %v560
        %562 = vmatmul.bf16.gmra.mxu0 %v466
        %v563 = vpop.f32.mrf.mxu0
        %v564 = vadd.f32 0.0, %v563
        %v565 = vpop.f32.mrf.mxu0
        %v566 = vadd.f32 0.0, %v565
        %567 = vmatmul.bf16.gmra.mxu0 %v467
        %v568 = vpop.f32.mrf.mxu0
        %v569 = vadd.f32 0.0, %v568
        %v570 = vpop.f32.mrf.mxu0
        %v571 = vadd.f32 0.0, %v570
        %572 = vdwg.mxu0
        %v573 = vadd.f32 %v380, %v534
        %v574 = vadd.f32 %v381, %v536
        %v575 = vadd.f32 %v382, %v539
        %v576 = vadd.f32 %v383, %v541
        %v577 = vadd.f32 %v384, %v544
        %v578 = vadd.f32 %v385, %v546
        %v579 = vadd.f32 %v386, %v549
        %v580 = vadd.f32 %v387, %v551
        %v581 = vadd.f32 %v388, %v554
        %v582 = vadd.f32 %v389, %v556
        %v583 = vadd.f32 %v390, %v559
        %v584 = vadd.f32 %v391, %v561
        %v585 = vadd.f32 %v392, %v564
        %v586 = vadd.f32 %v393, %v566
        %v587 = vadd.f32 %v394, %v569
        %v588 = vadd.f32 %v395, %v571
        %589 = vst [vmem:[#allocation2] sm:$0xff] %v573
        %590 = vst [vmem:[#allocation2 + $0x8] sm:$0xff] %v574
        %591 = vst [vmem:[#allocation2 + $0x10] sm:$0xff] %v575
        %592 = vst [vmem:[#allocation2 + $0x18] sm:$0xff] %v576
        %593 = vst [vmem:[#allocation2 + $0x20] sm:$0xff] %v577
        %594 = vst [vmem:[#allocation2 + $0x28] sm:$0xff] %v578
        %595 = vst [vmem:[#allocation2 + $0x30] sm:$0xff] %v579
        %596 = vst [vmem:[#allocation2 + $0x38] sm:$0xff] %v580
        %597 = vst [vmem:[#allocation2 + $0x40] sm:$0xff] %v581
        %598 = vst [vmem:[#allocation2 + $0x48] sm:$0xff] %v582
        %599 = vst [vmem:[#allocation2 + $0x50] sm:$0xff] %v583
        %600 = vst [vmem:[#allocation2 + $0x58] sm:$0xff] %v584
        %601 = vst [vmem:[#allocation2 + $0x60] sm:$0xff] %v585
        %602 = vst [vmem:[#allocation2 + $0x68] sm:$0xff] %v586
        %603 = vst [vmem:[#allocation2 + $0x70] sm:$0xff] %v587
        %604 = vst [vmem:[#allocation2 + $0x78] sm:$0xff] %v588
        %p605 = scmp.eq.s32.totalorder %s33, 1
        // Predicated region
        $region61: #{tpu_custom_call.1} parent=39 // pred_check
          %p606 = pneg %p605
        $region62: #{tpu_custom_call.1} parent=39 // pred_check_branch
          %608 = sbr.rel (%p606) target = $region64
        $region63: #{tpu_custom_call.1} parent=39 // pred_region
          %v609 = vld [vmem:[#allocation2] sm:$0xff]
          %v610 = vld [vmem:[#allocation2 + $0x8] sm:$0xff]
          %v611 = vld [vmem:[#allocation2 + $0x10] sm:$0xff]
          %v612 = vld [vmem:[#allocation2 + $0x18] sm:$0xff]
          %v613 = vld [vmem:[#allocation2 + $0x20] sm:$0xff]
          %v614 = vld [vmem:[#allocation2 + $0x28] sm:$0xff]
          %v615 = vld [vmem:[#allocation2 + $0x30] sm:$0xff]
          %v616 = vld [vmem:[#allocation2 + $0x38] sm:$0xff]
          %v617 = vld [vmem:[#allocation2 + $0x40] sm:$0xff]
          %v618 = vld [vmem:[#allocation2 + $0x48] sm:$0xff]
          %v619 = vld [vmem:[#allocation2 + $0x50] sm:$0xff]
          %v620 = vld [vmem:[#allocation2 + $0x58] sm:$0xff]
          %v621 = vld [vmem:[#allocation2 + $0x60] sm:$0xff]
          %v622 = vld [vmem:[#allocation2 + $0x68] sm:$0xff]
          %v623 = vld [vmem:[#allocation2 + $0x70] sm:$0xff]
          %v624 = vld [vmem:[#allocation2 + $0x78] sm:$0xff]
          %v625 = vld [vmem:[%s2] sm:$0x1]
          %v627 = vperm.slane %v625, 0
          %v629 = vadd.f32 %v609, %v627
          %v630 = vadd.f32 %v610, %v627
          %v631 = vadd.f32 %v611, %v627
          %v632 = vadd.f32 %v612, %v627
          %v633 = vadd.f32 %v613, %v627
          %v634 = vadd.f32 %v614, %v627
          %v635 = vadd.f32 %v615, %v627
          %v636 = vadd.f32 %v616, %v627
          %v637 = vadd.f32 %v617, %v627
          %v638 = vadd.f32 %v618, %v627
          %v639 = vadd.f32 %v619, %v627
          %v640 = vadd.f32 %v620, %v627
          %v641 = vadd.f32 %v621, %v627
          %v642 = vadd.f32 %v622, %v627
          %v643 = vadd.f32 %v623, %v627
          %v644 = vadd.f32 %v624, %v627
          %v645 = vmax.f32 %v629, 0.0
          %v646 = vmax.f32 %v630, 0.0
          %v647 = vmax.f32 %v631, 0.0
          %v648 = vmax.f32 %v632, 0.0
          %v649 = vmax.f32 %v633, 0.0
          %v650 = vmax.f32 %v634, 0.0
          %v651 = vmax.f32 %v635, 0.0
          %v652 = vmax.f32 %v636, 0.0
          %v653 = vmax.f32 %v637, 0.0
          %v654 = vmax.f32 %v638, 0.0
          %v655 = vmax.f32 %v639, 0.0
          %v656 = vmax.f32 %v640, 0.0
          %v657 = vmax.f32 %v641, 0.0
          %v658 = vmax.f32 %v642, 0.0
          %v659 = vmax.f32 %v643, 0.0
          %v660 = vmax.f32 %v644, 0.0
          %v661 = vpack.c.bf16 %v646, %v645
          %v662 = vpack.c.bf16 %v648, %v647
          %v663 = vpack.c.bf16 %v650, %v649
          %v664 = vpack.c.bf16 %v652, %v651
          %v665 = vpack.c.bf16 %v654, %v653
          %v666 = vpack.c.bf16 %v656, %v655
          %v667 = vpack.c.bf16 %v658, %v657
          %v668 = vpack.c.bf16 %v660, %v659
          %v669 = vld [vmem:[#allocation8] sm:$0xf]
          %v670 = vld [vmem:[#allocation8 + $0x4] sm:$0xf]
          %v671 = vld [vmem:[#allocation8 + $0x8] sm:$0xf]
          %v672 = vld [vmem:[#allocation8 + $0xc] sm:$0xf]
          %v673 = vld [vmem:[#allocation8 + $0x10] sm:$0xf]
          %v674 = vld [vmem:[#allocation8 + $0x14] sm:$0xf]
          %v675 = vld [vmem:[#allocation8 + $0x18] sm:$0xf]
          %v676 = vld [vmem:[#allocation8 + $0x1c] sm:$0xf]
          %v677 = vld [vmem:[#allocation8 + $0x20] sm:$0xf]
          %v678 = vld [vmem:[#allocation8 + $0x24] sm:$0xf]
          %v679 = vld [vmem:[#allocation8 + $0x28] sm:$0xf]
          %v680 = vld [vmem:[#allocation8 + $0x2c] sm:$0xf]
          %v681 = vld [vmem:[#allocation8 + $0x30] sm:$0xf]
          %v682 = vld [vmem:[#allocation8 + $0x34] sm:$0xf]
          %v683 = vld [vmem:[#allocation8 + $0x38] sm:$0xf]
          %v684 = vld [vmem:[#allocation8 + $0x3c] sm:$0xf]
          %v701 = vunpack.c.l.b16 %v669
          %v702 = vunpack.c.l.b16 %v670
          %v703 = vunpack.c.l.b16 %v671
          %v704 = vunpack.c.l.b16 %v672
          %v705 = vunpack.c.l.b16 %v673
          %v706 = vunpack.c.l.b16 %v674
          %v707 = vunpack.c.l.b16 %v675
          %v708 = vunpack.c.l.b16 %v676
          %v709 = vunpack.c.l.b16 %v677
          %v710 = vunpack.c.l.b16 %v678
          %v711 = vunpack.c.l.b16 %v679
          %v712 = vunpack.c.l.b16 %v680
          %v713 = vunpack.c.l.b16 %v681
          %v714 = vunpack.c.l.b16 %v682
          %v715 = vunpack.c.l.b16 %v683
          %v716 = vunpack.c.l.b16 %v684
          %v717 = vpack.c.b16 %v702, %v701
          %v718 = vpack.c.b16 %v704, %v703
          %v719 = vpack.c.b16 %v706, %v705
          %v720 = vpack.c.b16 %v708, %v707
          %v721 = vpack.c.b16 %v710, %v709
          %v722 = vpack.c.b16 %v712, %v711
          %v723 = vpack.c.b16 %v714, %v713
          %v724 = vpack.c.b16 %v716, %v715
          %733 = vmatpush.bf16.msra.mxu0 %v724
          %734 = vmatpush.bf16.msra.mxu0 %v723
          %735 = vmatpush.bf16.msra.mxu0 %v722
          %736 = vmatpush.bf16.msra.mxu0 %v721
          %737 = vmatpush.bf16.msra.mxu0 %v720
          %738 = vmatpush.bf16.msra.mxu0 %v719
          %739 = vmatpush.bf16.msra.mxu0 %v718
          %740 = vmatpush.bf16.msra.mxu0 %v717
          %741 = vmatmul.bf16.gmra.mxu0 %v661
          %v742 = vpop.f32.mrf.mxu0
          %v743 = vadd.f32 0.0, %v742
          %v744 = vpop.f32.mrf.mxu0
          %v745 = vadd.f32 0.0, %v744
          %746 = vmatmul.bf16.gmra.mxu0 %v662
          %v747 = vpop.f32.mrf.mxu0
          %v748 = vadd.f32 0.0, %v747
          %v749 = vpop.f32.mrf.mxu0
          %v750 = vadd.f32 0.0, %v749
          %751 = vmatmul.bf16.gmra.mxu0 %v663
          %v752 = vpop.f32.mrf.mxu0
          %v753 = vadd.f32 0.0, %v752
          %v754 = vpop.f32.mrf.mxu0
          %v755 = vadd.f32 0.0, %v754
          %756 = vmatmul.bf16.gmra.mxu0 %v664
          %v757 = vpop.f32.mrf.mxu0
          %v758 = vadd.f32 0.0, %v757
          %v759 = vpop.f32.mrf.mxu0
          %v760 = vadd.f32 0.0, %v759
          %761 = vmatmul.bf16.gmra.mxu0 %v665
          %v762 = vpop.f32.mrf.mxu0
          %v763 = vadd.f32 0.0, %v762
          %v764 = vpop.f32.mrf.mxu0
          %v765 = vadd.f32 0.0, %v764
          %766 = vmatmul.bf16.gmra.mxu0 %v666
          %v767 = vpop.f32.mrf.mxu0
          %v768 = vadd.f32 0.0, %v767
          %v769 = vpop.f32.mrf.mxu0
          %v770 = vadd.f32 0.0, %v769
          %771 = vmatmul.bf16.gmra.mxu0 %v667
          %v772 = vpop.f32.mrf.mxu0
          %v773 = vadd.f32 0.0, %v772
          %v774 = vpop.f32.mrf.mxu0
          %v775 = vadd.f32 0.0, %v774
          %776 = vmatmul.bf16.gmra.mxu0 %v668
          %v777 = vpop.f32.mrf.mxu0
          %v778 = vadd.f32 0.0, %v777
          %v779 = vpop.f32.mrf.mxu0
          %v780 = vadd.f32 0.0, %v779
          %781 = vdwg.mxu0
          %v782 = vld [vmem:[%s320] sm:$0xf]
          %v783 = vpack.c.bf16 %v745, %v743
          %v784 = vpack.c.bf16 %v750, %v748
          %v785 = vpack.c.bf16 %v755, %v753
          %v786 = vpack.c.bf16 %v760, %v758
          %v787 = vpack.c.bf16 %v765, %v763
          %v788 = vpack.c.bf16 %v770, %v768
          %v789 = vpack.c.bf16 %v775, %v773
          %v790 = vpack.c.bf16 %v780, %v778
          %791 = vmatpush.bf16.msra.mxu0 %v790
          %792 = vmatpush.bf16.msra.mxu0 %v789
          %793 = vmatpush.bf16.msra.mxu0 %v788
          %794 = vmatpush.bf16.msra.mxu0 %v787
          %795 = vmatpush.bf16.msra.mxu0 %v786
          %796 = vmatpush.bf16.msra.mxu0 %v785
          %797 = vmatpush.bf16.msra.mxu0 %v784
          %798 = vmatpush.bf16.msra.mxu0 %v783
          %799 = vmatmul.bf16.gmra.mxu0 %v782
          %v800 = vpop.f32.mrf.mxu0
          %v801 = vadd.f32 0.0, %v800
          %v802 = vpop.f32.mrf.mxu0
          %803 = vdwg.mxu0
          %804 = vst [vmem:[%s357] sm:$0xff] %v801
        $region64: #{tpu_custom_call.1} parent=39 // pred_fallthru
          _
        %s805 = sand.u32 %s170, 1
        %s806 = scalar_lea.sflag [#allocation5], %s805
        %s807 = sand.u32 %s170, 1
        %s808 = smul.addr %s807, 8
        %s809 = scalar_lea.vmem [#allocation11], %s808
        // Predicated region
        $region65: #{tpu_custom_call.1} parent=39 // pred_check
          %p810 = pneg %p180
        $region66: #{tpu_custom_call.1} parent=39 // pred_check_branch
          %812 = sbr.rel (%p810) target = $region68
        $region67: #{tpu_custom_call.1} parent=39 // pred_region
          %814 = vsyncadd %s806, 0
          %s815 = smul.addr %s32, 8
          %s816 = scalar_lea.hbm %s5, %s815
          %s818 = sshll.u32 %s809, 4
          %s819 = int_to_ptr.vmem [resolvable:$true] %s818
          %s820 = sshll.u32 %s816, 4
          %s821 = int_to_ptr.hbm [resolvable:$true] %s820
          %823 = dma.vmem_to_hbm [thread:$0]  %s819, 128, %s821, %s806
        $region68: #{tpu_custom_call.1} parent=39 // pred_fallthru
          _
      $region40: #{tpu_custom_call.1} parent=5 // pred_fallthru
        _
      %p824 = scmp.le.s32.totalorder 2, %s23
      // Predicated region
      $region69: #{tpu_custom_call.1} parent=5 // pred_check
        %p825 = pneg %p824
      $region70: #{tpu_custom_call.1} parent=5 // pred_check_branch
        %827 = sbr.rel (%p825) target = $region72
      $region71: #{tpu_custom_call.1} parent=5 // pred_region
        %s828 = ssub.s32 %s23, 2
        // Predicated region
        $region73: #{tpu_custom_call.1} parent=71 // pred_check
          %p829 = pneg %p186
        $region74: #{tpu_custom_call.1} parent=71 // pred_check_branch
          %831 = sbr.rel (%p829) target = $region76
        $region75: #{tpu_custom_call.1} parent=71 // pred_region
          %s832 = sand.u32 %s171, 1
          %s833 = scalar_lea.sflag [#allocation5], %s832
          %s834 = sand.u32 %s171, 1
          %s835 = smul.addr %s834, 8
          %s836 = scalar_lea.vmem [#allocation11], %s835
          %838 = dma.done %s833, 128
        $region76: #{tpu_custom_call.1} parent=71 // pred_fallthru
          _
      $region72: #{tpu_custom_call.1} parent=5 // pred_fallthru
        _
    $region6: #{tpu_custom_call.1} parent=1 // loop_footer
      %s27 = sadd.s32 1, %s23
    $region7: #{tpu_custom_call.1} parent=1 // loop_footer_branch
      %22 = sbr.rel target = $region3
    $region8: #{tpu_custom_call.1} parent=1 // loop_exit
      _
    %839 = vsyncpa [#allocation4], 1
    %s840 = scalar_lea.sflag [#allocation4], 1
    %841 = vsyncpa %s840, 1
    %842 = vsyncpa [#allocation7], 1
    %s843 = scalar_lea.sflag [#allocation7], 1
    %844 = vsyncpa %s843, 1
    %845 = vsyncpa [#allocation10], 1
    %s846 = scalar_lea.sflag [#allocation10], 1
    %847 = vsyncpa %s846, 1
    %848 = vsyncpa [#allocation5], 1
    %s849 = scalar_lea.sflag [#allocation5], 1
    %850 = vsyncpa %s849, 1

</llo_original>
